<compile_context>
chip_gen: v7x
topology: tpu7x:2x2x1
jax: 0.10.0
libtpu: 0.0.40
codegen_flags: <defaults>
</compile_context>

<pallas_src>
import functools

import numpy as np
import jax
import jax.numpy as jnp
from jax.experimental import pallas as pl
from jax.experimental.pallas import tpu as pltpu


def _gauss_hist_kernel(x_ref, c_ref, o_ref, acc_ref, *, inv_sigma, sub_n, unroll):
    step = pl.program_id(1)

    # Zero this split's accumulator on its first reduction step.
    @pl.when(step == 0)
    def _():
        acc_ref[...] = jnp.zeros_like(acc_ref)

    c = c_ref[...]                                   # (bins, 1), pre-scaled by 1/sigma

    # Process `unroll` lane-dense sub-tiles, tree-add in vregs, single acc RMW.
    psum = None
    for u in range(unroll):                          # static, small
        xs = x_ref[:, pl.ds(u * sub_n, sub_n)] * inv_sigma   # (1, sub_n)
        d = xs - c                                            # (bins, sub_n)
        g = jnp.exp(-0.5 * (d * d))                           # unnormalized Gaussian
        psum = g if psum is None else psum + g
    acc_ref[...] += psum                             # one vst pass per grid step

    # On the last reduction step, collapse the lane axis (XLU) and emit a tiny
    # (1, bins, 1) output block.
    @pl.when(step == pl.num_programs(1) - 1)
    def _():
        o_ref[...] = jnp.sum(acc_ref[...], axis=-1, keepdims=True)[None]


def gaussian_histogram(x, *, bins, vmin, vmax, sigma,
                       tile_n=None, num_splits=1, unroll=2):
    """x: 1-D f32 array of shape (N,). Returns f32 array of shape (bins,)."""
    x = jnp.asarray(x, jnp.float32).reshape(-1)
    n = int(x.shape[0])
    delta = float(vmax - vmin) / float(bins)
    inv_sigma = 1.0 / float(sigma)

    centers = float(vmin) + delta * (jnp.arange(bins, dtype=jnp.float32) + 0.5)
    centers_s = (centers * inv_sigma).reshape(bins, 1)   # pre-divided by sigma

    # Tile size: multiple of unroll*128 lanes; adaptive for small N, capped at 16384.
    quantum = unroll * 128
    if tile_n is None:
        per_split = -(-n // num_splits)
        tile_n = min(-(-per_split // quantum) * quantum, 16384)
    tile_n = max(-(-tile_n // quantum) * quantum, quantum)
    sub_n = tile_n // unroll

    steps = max(1, -(-n // (num_splits * tile_n)))
    n_pad = num_splits * steps * tile_n
    if n_pad != n:
        # Pad value is >= 20 sigma beyond every bin center (centers <= vmax), so
        # exp(-0.5 * z^2) with z >= 20 underflows to exactly 0 in f32.
        pad_val = float(vmax) + 20.0 * float(sigma)
        x = jnp.concatenate([x, jnp.full((n_pad - n,), pad_val, jnp.float32)])
    x2d = x.reshape(1, n_pad)                         # lane-dense row of samples

    kernel = functools.partial(_gauss_hist_kernel, inv_sigma=inv_sigma,
                               sub_n=sub_n, unroll=unroll)

    cost = pl.CostEstimate(
        flops=5 * bins * n_pad,                       # sub, 2x mul, add, acc per elem
        transcendentals=bins * n_pad,                 # one exp per (bin, sample)
        bytes_accessed=4 * n_pad + 4 * bins + 4 * num_splits * bins)

    out = pl.pallas_call(
        kernel,
        out_shape=jax.ShapeDtypeStruct((num_splits, bins, 1), jnp.float32),
        grid_spec=pltpu.PrefetchScalarGridSpec(
            num_scalar_prefetch=0,
            grid=(num_splits, steps),                 # reduction axis last
            in_specs=[
                # x tile: (1, tile_n) — sublane dim equals full array dim (1),
                # lane dim a multiple of 128.
                pl.BlockSpec((1, tile_n), lambda s, i: (0, s * steps + i)),
                # pre-scaled centers, resident (full-array block).
                pl.BlockSpec((bins, 1), lambda s, i: (0, 0)),
            ],
            # Tiny per-split output block, written once on the last step.
            out_specs=pl.BlockSpec((1, bins, 1), lambda s, i: (s, 0, 0)),
            # Per-lane f32 accumulator lives in VMEM scratch, never hits HBM.
            scratch_shapes=[pltpu.VMEM((bins, sub_n), jnp.float32)],
        ),
        compiler_params=pltpu.CompilerParams(
            dimension_semantics=("parallel", "arbitrary")),
        cost_estimate=cost,
    )(x2d, centers_s)

    # One-shot normalization on the tiny (num_splits, bins) result.
    scale = delta * inv_sigma / np.sqrt(2.0 * np.pi)
    return (out[:, :, 0].sum(axis=0) * scale).astype(jnp.float32)


def _reference(x, *, bins, vmin, vmax, sigma):
    x = np.asarray(x, np.float64).reshape(-1)
    delta = float(vmax - vmin) / float(bins)
    centers = float(vmin) + delta * (np.arange(bins) + 0.5)
    d = x[None, :] - centers[:, None]
    vals = np.exp(-0.5 * (d / sigma) ** 2) / (sigma * np.sqrt(2 * np.pi)) * delta
    return vals.sum(axis=1)


if __name__ == "__main__":
    key = jax.random.PRNGKey(0)
    # Module hyperparameters (deterministic, in-script): 16 bins over [0, 1].
    bins, vmin, vmax, sigma = 16, 0.0, 1.0, 0.1
    n = 1000  # deliberately NOT a multiple of the tile size (exercises padding)
    x = jax.random.uniform(key, (n,), dtype=jnp.float32, minval=vmin, maxval=vmax)

    ref = _reference(np.asarray(x), bins=bins, vmin=vmin, vmax=vmax, sigma=sigma)

    # Default configuration (num_splits=1: v5e/v6e single-TC path).
    out = gaussian_histogram(x, bins=bins, vmin=vmin, vmax=vmax, sigma=sigma)
    out = jax.block_until_ready(out)
    assert out.shape == (bins,)
    assert np.allclose(np.asarray(out), ref, rtol=1e-4, atol=1e-4), (
        np.max(np.abs(np.asarray(out) - ref)))

    # Two-way split path (v7x two-TensorCore configuration).
    out2 = gaussian_histogram(x, bins=bins, vmin=vmin, vmax=vmax, sigma=sigma,
                              num_splits=2)
    out2 = jax.block_until_ready(out2)
    assert np.allclose(np.asarray(out2), ref, rtol=1e-4, atol=1e-4), (
        np.max(np.abs(np.asarray(out2) - ref)))

    print("KERNEL_OK")
</pallas_src>

<mosaic_0001>
module attributes {stable_mosaic.version = 11 : i64} {
  func.func @_gauss_hist_kernel(%arg0: i32, %arg1: i32, %arg2: memref<1x1024xf32, #tpu.memory_space<vmem>>, %arg3: memref<16x1xf32, #tpu.memory_space<vmem>>, %arg4: memref<1x16x1xf32, #tpu.memory_space<vmem>>, %arg5: memref<16x512xf32, #tpu.memory_space<vmem>>) attributes {dimension_semantics = [#tpu.dimension_semantics<parallel>, #tpu.dimension_semantics<arbitrary>], iteration_bounds = array<i64: 1, 1>, scalar_prefetch = 0 : i64, scratch_operands = 1 : i64, tpu.core_type = #tpu.core_type<tc>, window_params = [{transform_indices = @transform_0, window_bounds = array<i64: 1, 1024>}, {pipeline_mode = #tpu.pipeline_mode<synchronous>, transform_indices = @transform_1, window_bounds = array<i64: 16, 1>}, {transform_indices = @transform_2, window_bounds = array<i64: 1, 16, 1>}]} {
    %c0_i32 = arith.constant 0 : i32
    %0 = arith.cmpi eq, %arg1, %c0_i32 : i32
    %1 = arith.extui %0 : i1 to i32
    %c0_i32_0 = arith.constant 0 : i32
    %2 = arith.cmpi ne, %1, %c0_i32_0 : i32
    scf.if %2 {
      %cst_14 = arith.constant 0.000000e+00 : f32
      %31 = vector.broadcast %cst_14 : f32 to vector<16x512xf32>
      %c0_15 = arith.constant 0 : index
      %c0_16 = arith.constant 0 : index
      %32 = vector.load %arg5[%c0_15, %c0_16] : memref<16x512xf32, #tpu.memory_space<vmem>>, vector<16x512xf32>
      tpu.vector_store %arg5[%c0_15, %c0_16], %31 {strides = array<i32>} : memref<16x512xf32, #tpu.memory_space<vmem>>, vector<16x512xf32>,
    } else {
    }
    %c0 = arith.constant 0 : index
    %c0_1 = arith.constant 0 : index
    %3 = vector.load %arg3[%c0, %c0_1] : memref<16x1xf32, #tpu.memory_space<vmem>>, vector<16x1xf32>
    %c0_2 = arith.constant 0 : index
    %c0_3 = arith.constant 0 : index
    %4 = vector.load %arg2[%c0_2, %c0_3] : memref<1x1024xf32, #tpu.memory_space<vmem>>, vector<1x512xf32>
    %cst = arith.constant 1.000000e+01 : f32
    %5 = vector.broadcast %cst : f32 to vector<1x512xf32>
    %6 = arith.mulf %4, %5 : vector<1x512xf32>
    %7 = vector.broadcast %6 : vector<1x512xf32> to vector<16x512xf32>
    %8 = vector.broadcast %3 : vector<16x1xf32> to vector<16x512xf32>
    %9 = arith.subf %7, %8 : vector<16x512xf32>
    %10 = arith.mulf %9, %9 : vector<16x512xf32>
    %cst_4 = arith.constant -5.000000e-01 : f32
    %11 = vector.broadcast %cst_4 : f32 to vector<16x512xf32>
    %12 = arith.mulf %11, %10 : vector<16x512xf32>
    %13 = math.exp %12 : vector<16x512xf32>
    %c0_5 = arith.constant 0 : index
    %c512 = arith.constant 512 : index
    %14 = vector.load %arg2[%c0_5, %c512] : memref<1x1024xf32, #tpu.memory_space<vmem>>, vector<1x512xf32>
    %cst_6 = arith.constant 1.000000e+01 : f32
    %15 = vector.broadcast %cst_6 : f32 to vector<1x512xf32>
    %16 = arith.mulf %14, %15 : vector<1x512xf32>
    %17 = vector.broadcast %16 : vector<1x512xf32> to vector<16x512xf32>
    %18 = vector.broadcast %3 : vector<16x1xf32> to vector<16x512xf32>
    %19 = arith.subf %17, %18 : vector<16x512xf32>
    %20 = arith.mulf %19, %19 : vector<16x512xf32>
    %cst_7 = arith.constant -5.000000e-01 : f32
    %21 = vector.broadcast %cst_7 : f32 to vector<16x512xf32>
    %22 = arith.mulf %21, %20 : vector<16x512xf32>
    %23 = math.exp %22 : vector<16x512xf32>
    %24 = arith.addf %13, %23 : vector<16x512xf32>
    %c0_8 = arith.constant 0 : index
    %c0_9 = arith.constant 0 : index
    %25 = vector.load %arg5[%c0_8, %c0_9] : memref<16x512xf32, #tpu.memory_space<vmem>>, vector<16x512xf32>
    %26 = arith.addf %25, %24 : vector<16x512xf32>
    %c0_10 = arith.constant 0 : index
    %c0_11 = arith.constant 0 : index
    %27 = vector.load %arg5[%c0_10, %c0_11] : memref<16x512xf32, #tpu.memory_space<vmem>>, vector<16x512xf32>
    tpu.vector_store %arg5[%c0_10, %c0_11], %26 {strides = array<i32>} : memref<16x512xf32, #tpu.memory_space<vmem>>, vector<16x512xf32>,
    %c0_i32_12 = arith.constant 0 : i32
    %28 = arith.cmpi eq, %arg1, %c0_i32_12 : i32
    %29 = arith.extui %28 : i1 to i32
    %c0_i32_13 = arith.constant 0 : i32
    %30 = arith.cmpi ne, %29, %c0_i32_13 : i32
    scf.if %30 {
      %c0_14 = arith.constant 0 : index
      %c0_15 = arith.constant 0 : index
      %31 = vector.load %arg5[%c0_14, %c0_15] : memref<16x512xf32, #tpu.memory_space<vmem>>, vector<16x512xf32>
      %cst_16 = arith.constant dense<0.000000e+00> : vector<16xf32>
      %32 = vector.multi_reduction <add>, %31, %cst_16 [1] : vector<16x512xf32> to vector<16xf32>
      %33 = vector.shape_cast %32 : vector<16xf32> to vector<16x1xf32>
      %34 = vector.shape_cast %33 : vector<16x1xf32> to vector<1x16x1xf32>
      %c0_17 = arith.constant 0 : index
      %c0_18 = arith.constant 0 : index
      %c0_19 = arith.constant 0 : index
      %35 = vector.load %arg4[%c0_17, %c0_18, %c0_19] : memref<1x16x1xf32, #tpu.memory_space<vmem>>, vector<1x16x1xf32>
      tpu.vector_store %arg4[%c0_17, %c0_18, %c0_19], %34 {strides = array<i32>} : memref<1x16x1xf32, #tpu.memory_space<vmem>>, vector<1x16x1xf32>,
    } else {
    }
    return
  }
  func.func @transform_0(%arg0: i32, %arg1: i32) -> (i32, i32) {
    %c1_i32 = arith.constant 1 : i32
    %0 = arith.muli %arg0, %c1_i32 : i32
    %1 = arith.addi %0, %arg1 : i32
    %c0_i32 = arith.constant 0 : i32
    %c0_i32_0 = arith.constant 0 : i32
    return %c0_i32, %1 : i32, i32
  }
  func.func @transform_1(%arg0: i32, %arg1: i32) -> (i32, i32) {
    %c0_i32 = arith.constant 0 : i32
    %c0_i32_0 = arith.constant 0 : i32
    %c0_i32_1 = arith.constant 0 : i32
    return %c0_i32, %c0_i32_0 : i32, i32
  }
  func.func @transform_2(%arg0: i32, %arg1: i32) -> (i32, i32, i32) {
    %c0_i32 = arith.constant 0 : i32
    %c0_i32_0 = arith.constant 0 : i32
    %c0_i32_1 = arith.constant 0 : i32
    return %arg0, %c0_i32, %c0_i32_0 : i32, i32, i32
  }
}

</mosaic_0001>

<llo_original>
// kernel: tpu_custom_call.1
$region0: #{tpu_custom_call.1}
  #allocation0 [shape = 'u32[]', space=smem, size = 0x4, offset = 0x4, fixed_abs, tag = 'smem constant byte address 0x4 - core index']
  #allocation1 [shape = 'u32[144,128]{1,0:T(1,128)}', space=vmem, size = 0x12000, scoped, tag = 'internal scratch']
  #allocation2 [shape = 'f32[16,512]{1,0:T(8,128)}', space=vmem, size = 0x8000, scoped, tag = 'scratch operand']
  %s0 = inlined_call_operand.vmem [shape: f32[1,1024], index: 0, kind: input, shape index: {}]
  %s1 = inlined_call_operand.vmem [shape: f32[16,1], index: 1, kind: input, shape index: {}]
  %s2 = inlined_call_operand.vmem [shape: f32[1,16,1], index: 2, kind: output, shape index: {}]
  %s3 = sld [smem:[#allocation0]]
  $region26: #{tpu_custom_call.1} parent=0
    _
  %s5 = ssub.s32 1, %s3
  %s6 = scalar_select 0, %s5, %s3
  // Predicated region
  $region2: #{tpu_custom_call.1} parent=0 // pred_check
    _
  $region3: #{tpu_custom_call.1} parent=0 // pred_check_branch
    %8 = sbr.rel (0) target = $region5
  $region4: #{tpu_custom_call.1} parent=0 // pred_region
    %s9 = sadd.s32 0, 0
    %s10 = smul.u32 8, %s9
    %p11 = scmp.lt.s32.totalorder %s10, 7
    %s12 = scalar_select %p11, %s10, 7
    %s13 = scalar_lea.vmem %s0, %s12
    %s14 = sadd.s32 0, 0
    %s15 = smul.u32 8, %s14
  $region5: #{tpu_custom_call.1} parent=0 // pred_fallthru
    _
  // Predicated region
  $region6: #{tpu_custom_call.1} parent=0 // pred_check
    _
  $region7: #{tpu_custom_call.1} parent=0 // pred_check_branch
    %17 = sbr.rel (0) target = $region9
  $region8: #{tpu_custom_call.1} parent=0 // pred_region
    _
  $region9: #{tpu_custom_call.1} parent=0 // pred_fallthru
    _
  %s18 = sadd.s32 0, 0
  %s19 = smul.u32 8, %s18
  %p20 = scmp.lt.s32.totalorder %s19, 7
  %s21 = scalar_select %p20, %s19, 7
  %s22 = scalar_lea.vmem %s0, %s21
  %s23 = sadd.s32 0, 0
  %s24 = smul.u32 8, %s23
  %p25 = scmp.lt.s32.totalorder %s24, 7
  %s26 = scalar_select %p25, %s24, 7
  %s27 = scalar_lea.vmem %s0, %s26
  %s28 = sadd.s32 0, 0
  %s29 = smul.u32 8, %s28
  %p30 = scmp.eq.s32.totalorder 0, 0
  // Predicated region
  $region10: #{tpu_custom_call.1} parent=0 // pred_check
    %p31 = pneg %p30
  $region11: #{tpu_custom_call.1} parent=0 // pred_check_branch
    %33 = sbr.rel (%p31) target = $region13
  $region12: #{tpu_custom_call.1} parent=0 // pred_region
    %34 = vst [vmem:[#allocation2] sm:$0xff] 0.0
    %35 = vst [vmem:[#allocation2 + $0x8] sm:$0xff] 0.0
    %36 = vst [vmem:[#allocation2 + $0x10] sm:$0xff] 0.0
    %37 = vst [vmem:[#allocation2 + $0x18] sm:$0xff] 0.0
    %38 = vst [vmem:[#allocation2 + $0x20] sm:$0xff] 0.0
    %39 = vst [vmem:[#allocation2 + $0x28] sm:$0xff] 0.0
    %40 = vst [vmem:[#allocation2 + $0x30] sm:$0xff] 0.0
    %41 = vst [vmem:[#allocation2 + $0x38] sm:$0xff] 0.0
  $region13: #{tpu_custom_call.1} parent=0 // pred_fallthru
    _
  %v42 = vld [vmem:[%s1] sm:$0xff]
  %v43 = vld [vmem:[%s1 + $0x8] sm:$0xff]
  %v44 = vld [vmem:[%s27] sm:$0xf]
  %v45 = vmul.f32 %v44, 10.0
  %v47 = vlaneseq
  %v48 = vshrl.u32 %v47, 7
  %v49 = vsub.s32 0, %v48
  %v50 = vrot.slane %v45, %v49
  %v51 = vlaneseq
  %v52 = vshrl.u32 %v51, 7
  %v53 = vsub.s32 1, %v52
  %v54 = vrot.slane %v45, %v53
  %v55 = vlaneseq
  %v56 = vshrl.u32 %v55, 7
  %v57 = vsub.s32 2, %v56
  %v58 = vrot.slane %v45, %v57
  %v59 = vlaneseq
  %v60 = vshrl.u32 %v59, 7
  %v61 = vsub.s32 3, %v60
  %v62 = vrot.slane %v45, %v61
  %68 = vset.pattern.permute.xlu0 0
  %69 = vperm.xlu0 %68, %v42
  %v70 = vpop.permute.xlu0 %69
  %73 = vset.pattern.permute.xlu0 0
  %74 = vperm.xlu0 %73, %v43
  %v75 = vpop.permute.xlu0 %74
  %v77 = vsub.f32 %v50, %v70
  %v78 = vsub.f32 %v54, %v70
  %v79 = vsub.f32 %v58, %v70
  %v80 = vsub.f32 %v62, %v70
  %v81 = vsub.f32 %v50, %v75
  %v82 = vsub.f32 %v54, %v75
  %v83 = vsub.f32 %v58, %v75
  %v84 = vsub.f32 %v62, %v75
  %v85 = vmul.f32 %v77, %v77
  %v86 = vmul.f32 %v78, %v78
  %v87 = vmul.f32 %v79, %v79
  %v88 = vmul.f32 %v80, %v80
  %v89 = vmul.f32 %v81, %v81
  %v90 = vmul.f32 %v82, %v82
  %v91 = vmul.f32 %v83, %v83
  %v92 = vmul.f32 %v84, %v84
  %v93 = vmul.f32 %v85, -0.5
  %v94 = vmul.f32 %v86, -0.5
  %v95 = vmul.f32 %v87, -0.5
  %v96 = vmul.f32 %v88, -0.5
  %v97 = vmul.f32 %v89, -0.5
  %v98 = vmul.f32 %v90, -0.5
  %v99 = vmul.f32 %v91, -0.5
  %v100 = vmul.f32 %v92, -0.5
  %v101 = vmul.f32 %v93, 1.442695
  %v102 = vpow.pop %v101
  %v103 = vmul.f32 %v94, 1.442695
  %v104 = vpow.pop %v103
  %v105 = vmul.f32 %v95, 1.442695
  %v106 = vpow.pop %v105
  %v107 = vmul.f32 %v96, 1.442695
  %v108 = vpow.pop %v107
  %v109 = vmul.f32 %v97, 1.442695
  %v110 = vpow.pop %v109
  %v111 = vmul.f32 %v98, 1.442695
  %v112 = vpow.pop %v111
  %v113 = vmul.f32 %v99, 1.442695
  %v114 = vpow.pop %v113
  %v115 = vmul.f32 %v100, 1.442695
  %v116 = vpow.pop %v115
  %v117 = vld [vmem:[%s27 + $0x4] sm:$0xf]
  %v118 = vmul.f32 %v117, 10.0
  %v120 = vlaneseq
  %v121 = vshrl.u32 %v120, 7
  %v122 = vsub.s32 0, %v121
  %v123 = vrot.slane %v118, %v122
  %v124 = vlaneseq
  %v125 = vshrl.u32 %v124, 7
  %v126 = vsub.s32 1, %v125
  %v127 = vrot.slane %v118, %v126
  %v128 = vlaneseq
  %v129 = vshrl.u32 %v128, 7
  %v130 = vsub.s32 2, %v129
  %v131 = vrot.slane %v118, %v130
  %v132 = vlaneseq
  %v133 = vshrl.u32 %v132, 7
  %v134 = vsub.s32 3, %v133
  %v135 = vrot.slane %v118, %v134
  %v140 = vsub.f32 %v123, %v70
  %v141 = vsub.f32 %v127, %v70
  %v142 = vsub.f32 %v131, %v70
  %v143 = vsub.f32 %v135, %v70
  %v144 = vsub.f32 %v123, %v75
  %v145 = vsub.f32 %v127, %v75
  %v146 = vsub.f32 %v131, %v75
  %v147 = vsub.f32 %v135, %v75
  %v148 = vmul.f32 %v140, %v140
  %v149 = vmul.f32 %v141, %v141
  %v150 = vmul.f32 %v142, %v142
  %v151 = vmul.f32 %v143, %v143
  %v152 = vmul.f32 %v144, %v144
  %v153 = vmul.f32 %v145, %v145
  %v154 = vmul.f32 %v146, %v146
  %v155 = vmul.f32 %v147, %v147
  %v156 = vmul.f32 %v148, -0.5
  %v157 = vmul.f32 %v149, -0.5
  %v158 = vmul.f32 %v150, -0.5
  %v159 = vmul.f32 %v151, -0.5
  %v160 = vmul.f32 %v152, -0.5
  %v161 = vmul.f32 %v153, -0.5
  %v162 = vmul.f32 %v154, -0.5
  %v163 = vmul.f32 %v155, -0.5
  %v164 = vmul.f32 %v156, 1.442695
  %v165 = vpow.pop %v164
  %v166 = vmul.f32 %v157, 1.442695
  %v167 = vpow.pop %v166
  %v168 = vmul.f32 %v158, 1.442695
  %v169 = vpow.pop %v168
  %v170 = vmul.f32 %v159, 1.442695
  %v171 = vpow.pop %v170
  %v172 = vmul.f32 %v160, 1.442695
  %v173 = vpow.pop %v172
  %v174 = vmul.f32 %v161, 1.442695
  %v175 = vpow.pop %v174
  %v176 = vmul.f32 %v162, 1.442695
  %v177 = vpow.pop %v176
  %v178 = vmul.f32 %v163, 1.442695
  %v179 = vpow.pop %v178
  %v180 = vadd.f32 %v102, %v165
  %v181 = vadd.f32 %v104, %v167
  %v182 = vadd.f32 %v106, %v169
  %v183 = vadd.f32 %v108, %v171
  %v184 = vadd.f32 %v110, %v173
  %v185 = vadd.f32 %v112, %v175
  %v186 = vadd.f32 %v114, %v177
  %v187 = vadd.f32 %v116, %v179
  %v188 = vld [vmem:[#allocation2] sm:$0xff]
  %v189 = vld [vmem:[#allocation2 + $0x8] sm:$0xff]
  %v190 = vld [vmem:[#allocation2 + $0x10] sm:$0xff]
  %v191 = vld [vmem:[#allocation2 + $0x18] sm:$0xff]
  %v192 = vld [vmem:[#allocation2 + $0x20] sm:$0xff]
  %v193 = vld [vmem:[#allocation2 + $0x28] sm:$0xff]
  %v194 = vld [vmem:[#allocation2 + $0x30] sm:$0xff]
  %v195 = vld [vmem:[#allocation2 + $0x38] sm:$0xff]
  %v196 = vadd.f32 %v188, %v180
  %v197 = vadd.f32 %v189, %v181
  %v198 = vadd.f32 %v190, %v182
  %v199 = vadd.f32 %v191, %v183
  %v200 = vadd.f32 %v192, %v184
  %v201 = vadd.f32 %v193, %v185
  %v202 = vadd.f32 %v194, %v186
  %v203 = vadd.f32 %v195, %v187
  %204 = vst [vmem:[#allocation2] sm:$0xff] %v196
  %205 = vst [vmem:[#allocation2 + $0x8] sm:$0xff] %v197
  %206 = vst [vmem:[#allocation2 + $0x10] sm:$0xff] %v198
  %207 = vst [vmem:[#allocation2 + $0x18] sm:$0xff] %v199
  %208 = vst [vmem:[#allocation2 + $0x20] sm:$0xff] %v200
  %209 = vst [vmem:[#allocation2 + $0x28] sm:$0xff] %v201
  %210 = vst [vmem:[#allocation2 + $0x30] sm:$0xff] %v202
  %211 = vst [vmem:[#allocation2 + $0x38] sm:$0xff] %v203
  // Predicated region
  $region14: #{tpu_custom_call.1} parent=0 // pred_check
    %p212 = pneg %p30
  $region15: #{tpu_custom_call.1} parent=0 // pred_check_branch
    %214 = sbr.rel (%p212) target = $region17
  $region16: #{tpu_custom_call.1} parent=0 // pred_region
    %v215 = vld [vmem:[#allocation2] sm:$0xff]
    %v216 = vld [vmem:[#allocation2 + $0x8] sm:$0xff]
    %v217 = vld [vmem:[#allocation2 + $0x10] sm:$0xff]
    %v218 = vld [vmem:[#allocation2 + $0x18] sm:$0xff]
    %v219 = vld [vmem:[#allocation2 + $0x20] sm:$0xff]
    %v220 = vld [vmem:[#allocation2 + $0x28] sm:$0xff]
    %v221 = vld [vmem:[#allocation2 + $0x30] sm:$0xff]
    %v222 = vld [vmem:[#allocation2 + $0x38] sm:$0xff]
    %v223 = vadd.f32 %v215, %v216
    %v224 = vadd.f32 %v223, %v217
    %v225 = vadd.f32 %v224, %v218
    %226 = vadd.xlane.f32.xlu0 %v225
    %v227 = vpop.xlane.xlu0 %226
    %v228 = vadd.f32 %v219, %v220
    %v229 = vadd.f32 %v228, %v221
    %v230 = vadd.f32 %v229, %v222
    %231 = vadd.xlane.f32.xlu0 %v230
    %v232 = vpop.xlane.xlu0 %231
    %vm233 = vcmask 7168
    %234 = vst.msk [vmem:[%s2] sm:$0xff] %vm233, %v227
    %235 = vst.msk [vmem:[%s2 + $0x8] sm:$0xff] %vm233, %v232
  $region17: #{tpu_custom_call.1} parent=0 // pred_fallthru
    _
  // Predicated region
  $region18: #{tpu_custom_call.1} parent=0 // pred_check
    _
  $region19: #{tpu_custom_call.1} parent=0 // pred_check_branch
    %237 = sbr.rel (0) target = $region21
  $region20: #{tpu_custom_call.1} parent=0 // pred_region
    _
  $region21: #{tpu_custom_call.1} parent=0 // pred_fallthru
    _
  // Predicated region
  $region22: #{tpu_custom_call.1} parent=0 // pred_check
    _
  $region23: #{tpu_custom_call.1} parent=0 // pred_check_branch
    %239 = sbr.rel (0) target = $region25
  $region24: #{tpu_custom_call.1} parent=0 // pred_region
    _
  $region25: #{tpu_custom_call.1} parent=0 // pred_fallthru
    _

</llo_original>
